<compile_context>
chip_gen: v6e
topology: v6e:2x2x1
jax: 0.10.0
libtpu: 0.0.40
codegen_flags: <defaults>
</compile_context>

<pallas_src>
import jax
import jax.numpy as jnp
from jax.experimental import pallas as pl
from jax.experimental.pallas import tpu as pltpu

LN_EPS = 1e-5  # PyTorch nn.LayerNorm default


def _round_up(x, m):
    return (x + m - 1) // m * m


def bert_self_output_kernel(h_ref, x_ref, wT_ref, b_ref, g_ref, beta_ref, o_ref):
    # h_ref:   (TM, H) hidden_states tile (activation dtype; bf16 keeps the MXU in bf16)
    # x_ref:   (TM, H) residual tile
    # wT_ref:  (H, H)  dense weight, pre-transposed (y = h @ W^T), VMEM-resident
    # b/g/beta_ref: (1, H) f32 per-feature params (pre-cast once in prepare_params)
    y = jnp.dot(h_ref[...], wT_ref[...], preferred_element_type=jnp.float32)

    # Dropout: inference mode -> identity.
    # TODO(synk): training-mode dropout would need pltpu.prng_seed / prng_random_bits
    #             masking + 1/(1-p) scaling; torch's RNG stream is not reproducible.

    # Residual add + LayerNorm over the hidden (lane) axis, all in f32.
    z = y + b_ref[...] + x_ref[...].astype(jnp.float32)
    inv_h = 1.0 / z.shape[-1]
    mean = jnp.sum(z, axis=-1, keepdims=True) * inv_h
    ex2 = jnp.sum(z * z, axis=-1, keepdims=True) * inv_h   # single-pass moments
    var = ex2 - mean * mean
    inv = jax.lax.rsqrt(var + LN_EPS)
    o_ref[...] = ((z - mean) * inv * g_ref[...] + beta_ref[...]).astype(o_ref.dtype)


def prepare_params(weight, bias, gamma, beta, act_dtype):
    """One-time parameter prep (call at model-load time, not per layer call):
    transpose the torch-layout Linear weight so the kernel runs a plain MXU matmul
    (no per-call weight.T HBM round-trip) and pre-cast the small vectors to f32."""
    H = weight.shape[0]
    wT = jnp.asarray(weight).T.astype(act_dtype)
    b2 = jnp.asarray(bias).astype(jnp.float32).reshape(1, H)
    g2 = jnp.asarray(gamma).astype(jnp.float32).reshape(1, H)
    beta2 = jnp.asarray(beta).astype(jnp.float32).reshape(1, H)
    return wT, b2, g2, beta2


def _vmem_cap_bytes():
    # Generation-aware budget: v5e/v6e have 128 MiB VMEM, v7x 64 MiB; keep ~25% slack.
    try:
        phys = int(pltpu.get_tpu_info().vmem_capacity_bytes)
    except Exception:  # query unavailable -> assume the smallest (v7x)
        phys = 64 << 20
    return (phys // 4) * 3


def bert_self_output(hidden_states, input_tensor, weight=None, bias=None, gamma=None,
                     beta=None, *, block_rows=1024, prepared_params=None):
    """hidden_states, input_tensor: [B, S, H]; weight: [H, H] (torch Linear layout).
    Pass prepared_params=prepare_params(...) to skip the per-call weight transpose."""
    B, S, H = hidden_states.shape
    M = B * S
    out_dtype = hidden_states.dtype
    act_bytes = jnp.dtype(out_dtype).itemsize

    h2 = hidden_states.reshape(M, H)
    x2 = input_tensor.reshape(M, H)
    if prepared_params is None:
        prepared_params = prepare_params(weight, bias, gamma, beta, out_dtype)
    wT, b2, g2, beta2 = prepared_params

    # --- row-tile selection -------------------------------------------------
    # Sub-32-bit dtypes pack 2x (4x) rows per sublane -> keep TM a multiple of 16 (32).
    row_align = 8 * max(1, 4 // act_bytes)
    # Target >= ~8 grid steps when M allows it: gives the DMA pipeline work to overlap
    # with, and lets the 'parallel' axis be split across v7x's two TensorCores.
    TM = max(row_align, min(block_rows, _round_up(pl.cdiv(M, 8), row_align)))

    vmem_cap = _vmem_cap_bytes()

    def vmem_needed(tm):
        # h/x/out tiles double-buffered; weight + per-feature params single-buffered;
        # ~3 f32 (tm, H) compiler temporaries (y, z, z*z); fixed headroom.
        return (2 * 3 * tm * H * act_bytes
                + H * H * act_bytes + 3 * 8 * H * 4
                + 3 * tm * H * 4
                + (2 << 20))

    while vmem_needed(TM) > vmem_cap and TM > row_align:
        TM = max(row_align, _round_up(TM // 2, row_align))

    grid = (pl.cdiv(M, TM),)  # partial tail block handled by Pallas write-masking
    vmem_bytes = int(min(max(vmem_needed(TM), 8 << 20), vmem_cap))
    # TODO(synk): for H large enough that the resident (H, H) weight no longer fits
    #             VMEM (H >= 2048 f32 on v7x), add a K grid axis ('arbitrary') with an
    #             f32 accumulator scratch and do bias+residual+LN in a pl.when epilogue.

    def run(single_buffer_consts):
        def const_spec(shape):
            if single_buffer_consts:
                # Grid-invariant operands: no second pipeline buffer (saves H*H bytes).
                return pl.BlockSpec(shape, lambda i: (0, 0),
                                    pipeline_mode=pl.Buffered(1))
            return pl.BlockSpec(shape, lambda i: (0, 0))

        return pl.pallas_call(
            bert_self_output_kernel,
            out_shape=jax.ShapeDtypeStruct((M, H), out_dtype),
            grid_spec=pl.GridSpec(
                grid=grid,
                in_specs=[
                    pl.BlockSpec((TM, H), lambda i: (i, 0)),   # hidden_states tile
                    pl.BlockSpec((TM, H), lambda i: (i, 0)),   # residual tile
                    const_spec((H, H)),                        # weight (VMEM-resident)
                    const_spec((1, H)),                        # bias
                    const_spec((1, H)),                        # gamma
                    const_spec((1, H)),                        # beta
                ],
                out_specs=pl.BlockSpec((TM, H), lambda i: (i, 0)),
            ),
            compiler_params=pltpu.CompilerParams(
                # Rows are independent (LN reduces over H, which stays in-block):
                # single 'parallel' axis -> megacore sharding on v7x.
                dimension_semantics=("parallel",),
                vmem_limit_bytes=vmem_bytes,
            ),
        )(h2, x2, wT, b2, g2, beta2)

    try:
        out = run(True)
    except Exception:
        # Fallback if pipeline_mode=pl.Buffered(1) is unsupported in this JAX build.
        out = run(False)

    return out.reshape(B, S, H)


def _reference(hidden_states, input_tensor, weight, bias, gamma, beta):
    h = hidden_states.astype(jnp.float32)
    x = input_tensor.astype(jnp.float32)
    y = h @ weight.astype(jnp.float32).T + bias.astype(jnp.float32)
    z = y + x
    mu = jnp.mean(z, axis=-1, keepdims=True)
    va = jnp.mean((z - mu) ** 2, axis=-1, keepdims=True)
    return (z - mu) / jnp.sqrt(va + LN_EPS) * gamma.astype(jnp.float32) + beta.astype(jnp.float32)


if __name__ == "__main__":
    key = jax.random.PRNGKey(0)
    k1, k2, k3, k4 = jax.random.split(key, 4)

    ok = True

    # --- f32 check (small BERT-like toy shape) ---
    B, S, H = 2, 8, 32
    hidden_states = jax.random.normal(k1, (B, S, H), dtype=jnp.float32)
    input_tensor = jax.random.normal(k2, (B, S, H), dtype=jnp.float32)
    weight = jax.random.normal(k3, (H, H), dtype=jnp.float32) * (1.0 / jnp.sqrt(H))
    bias = jax.random.normal(k4, (H,), dtype=jnp.float32) * 0.01
    gamma = jnp.ones((H,), dtype=jnp.float32)
    beta = jnp.zeros((H,), dtype=jnp.float32)

    out = bert_self_output(hidden_states, input_tensor, weight, bias, gamma, beta)
    jax.block_until_ready(out)
    ref = _reference(hidden_states, input_tensor, weight, bias, gamma, beta)
    ok &= bool(jnp.allclose(out, ref, atol=1e-5, rtol=1e-5))

    # --- bf16 check (bf16 MXU path + pre-prepared params, as a model would use) ---
    hs_bf = hidden_states.astype(jnp.bfloat16)
    it_bf = input_tensor.astype(jnp.bfloat16)
    params_bf = prepare_params(weight, bias, gamma, beta, jnp.bfloat16)
    out_bf = bert_self_output(hs_bf, it_bf, prepared_params=params_bf)
    jax.block_until_ready(out_bf)
    ref_bf = _reference(hs_bf, it_bf, weight.astype(jnp.bfloat16), bias, gamma, beta)
    ok &= bool(jnp.allclose(out_bf.astype(jnp.float32), ref_bf, atol=3e-2, rtol=3e-2))

    # --- ragged-row check (M not a multiple of the row tile -> masked tail block) ---
    Br, Sr = 3, 5  # M = 15
    hs_r = jax.random.normal(k1, (Br, Sr, H), dtype=jnp.float32)
    it_r = jax.random.normal(k2, (Br, Sr, H), dtype=jnp.float32)
    out_r = bert_self_output(hs_r, it_r, weight, bias, gamma, beta)
    jax.block_until_ready(out_r)
    ref_r = _reference(hs_r, it_r, weight, bias, gamma, beta)
    ok &= bool(jnp.allclose(out_r, ref_r, atol=1e-5, rtol=1e-5))

    assert ok, "mismatch vs reference"
    print("KERNEL_OK")
</pallas_src>

<mosaic_0001>
module attributes {stable_mosaic.version = 11 : i64} {
  func.func @bert_self_output_kernel(%arg0: i32, %arg1: memref<8x32xf32, #tpu.memory_space<vmem>>, %arg2: memref<8x32xf32, #tpu.memory_space<vmem>>, %arg3: memref<32x32xf32, #tpu.memory_space<vmem>>, %arg4: memref<1x32xf32, #tpu.memory_space<vmem>>, %arg5: memref<1x32xf32, #tpu.memory_space<vmem>>, %arg6: memref<1x32xf32, #tpu.memory_space<vmem>>, %arg7: memref<8x32xf32, #tpu.memory_space<vmem>>) attributes {dimension_semantics = [#tpu.dimension_semantics<parallel>], iteration_bounds = array<i64: 2>, scalar_prefetch = 0 : i64, scratch_operands = 0 : i64, tpu.core_type = #tpu.core_type<tc>, window_params = [{transform_indices = @transform_0, window_bounds = array<i64: 8, 32>}, {transform_indices = @transform_1, window_bounds = array<i64: 8, 32>}, {pipeline_mode = #tpu.pipeline_mode<synchronous>, transform_indices = @transform_2, window_bounds = array<i64: 32, 32>}, {pipeline_mode = #tpu.pipeline_mode<synchronous>, transform_indices = @transform_3, window_bounds = array<i64: 1, 32>}, {pipeline_mode = #tpu.pipeline_mode<synchronous>, transform_indices = @transform_4, window_bounds = array<i64: 1, 32>}, {pipeline_mode = #tpu.pipeline_mode<synchronous>, transform_indices = @transform_5, window_bounds = array<i64: 1, 32>}, {transform_indices = @transform_6, window_bounds = array<i64: 8, 32>}]} {
    %c0 = arith.constant 0 : index
    %c0_0 = arith.constant 0 : index
    %0 = vector.load %arg1[%c0, %c0_0] : memref<8x32xf32, #tpu.memory_space<vmem>>, vector<8x32xf32>
    %c0_1 = arith.constant 0 : index
    %c0_2 = arith.constant 0 : index
    %1 = vector.load %arg3[%c0_1, %c0_2] : memref<32x32xf32, #tpu.memory_space<vmem>>, vector<32x32xf32>
    %cst = arith.constant dense<0.000000e+00> : vector<8x32xf32>
    %2 = tpu.matmul %0, %1, %cst {dimension_numbers = #tpu.dot_dimension_numbers<[1], [0], [0], [1], [0, 0, 1, 1], [], []>} : vector<8x32xf32>, vector<32x32xf32>, vector<8x32xf32> -> vector<8x32xf32>
    %c0_3 = arith.constant 0 : index
    %c0_4 = arith.constant 0 : index
    %3 = vector.load %arg4[%c0_3, %c0_4] : memref<1x32xf32, #tpu.memory_space<vmem>>, vector<1x32xf32>
    %4 = vector.broadcast %3 : vector<1x32xf32> to vector<8x32xf32>
    %5 = arith.addf %2, %4 : vector<8x32xf32>
    %c0_5 = arith.constant 0 : index
    %c0_6 = arith.constant 0 : index
    %6 = vector.load %arg2[%c0_5, %c0_6] : memref<8x32xf32, #tpu.memory_space<vmem>>, vector<8x32xf32>
    %7 = arith.addf %5, %6 : vector<8x32xf32>
    %cst_7 = arith.constant dense<0.000000e+00> : vector<8xf32>
    %8 = vector.multi_reduction <add>, %7, %cst_7 [1] : vector<8x32xf32> to vector<8xf32>
    %9 = vector.shape_cast %8 : vector<8xf32> to vector<8x1xf32>
    %cst_8 = arith.constant 3.125000e-02 : f32
    %10 = vector.broadcast %cst_8 : f32 to vector<8x1xf32>
    %11 = arith.mulf %9, %10 : vector<8x1xf32>
    %12 = arith.mulf %7, %7 : vector<8x32xf32>
    %cst_9 = arith.constant dense<0.000000e+00> : vector<8xf32>
    %13 = vector.multi_reduction <add>, %12, %cst_9 [1] : vector<8x32xf32> to vector<8xf32>
    %14 = vector.shape_cast %13 : vector<8xf32> to vector<8x1xf32>
    %cst_10 = arith.constant 3.125000e-02 : f32
    %15 = vector.broadcast %cst_10 : f32 to vector<8x1xf32>
    %16 = arith.mulf %14, %15 : vector<8x1xf32>
    %17 = arith.mulf %11, %11 : vector<8x1xf32>
    %18 = arith.subf %16, %17 : vector<8x1xf32>
    %cst_11 = arith.constant 9.99999974E-6 : f32
    %19 = vector.broadcast %cst_11 : f32 to vector<8x1xf32>
    %20 = arith.addf %18, %19 : vector<8x1xf32>
    %21 = math.rsqrt %20 : vector<8x1xf32>
    %22 = vector.broadcast %11 : vector<8x1xf32> to vector<8x32xf32>
    %23 = arith.subf %7, %22 : vector<8x32xf32>
    %24 = vector.broadcast %21 : vector<8x1xf32> to vector<8x32xf32>
    %25 = arith.mulf %23, %24 : vector<8x32xf32>
    %c0_12 = arith.constant 0 : index
    %c0_13 = arith.constant 0 : index
    %26 = vector.load %arg5[%c0_12, %c0_13] : memref<1x32xf32, #tpu.memory_space<vmem>>, vector<1x32xf32>
    %27 = vector.broadcast %26 : vector<1x32xf32> to vector<8x32xf32>
    %28 = arith.mulf %25, %27 : vector<8x32xf32>
    %c0_14 = arith.constant 0 : index
    %c0_15 = arith.constant 0 : index
    %29 = vector.load %arg6[%c0_14, %c0_15] : memref<1x32xf32, #tpu.memory_space<vmem>>, vector<1x32xf32>
    %30 = vector.broadcast %29 : vector<1x32xf32> to vector<8x32xf32>
    %31 = arith.addf %28, %30 : vector<8x32xf32>
    %c0_16 = arith.constant 0 : index
    %c0_17 = arith.constant 0 : index
    %32 = vector.load %arg7[%c0_16, %c0_17] : memref<8x32xf32, #tpu.memory_space<vmem>>, vector<8x32xf32>
    tpu.vector_store %arg7[%c0_16, %c0_17], %31 {strides = array<i32>} : memref<8x32xf32, #tpu.memory_space<vmem>>, vector<8x32xf32>,
    return
  }
  func.func @transform_0(%arg0: i32) -> (i32, i32) {
    %c0_i32 = arith.constant 0 : i32
    %c0_i32_0 = arith.constant 0 : i32
    return %arg0, %c0_i32 : i32, i32
  }
  func.func @transform_1(%arg0: i32) -> (i32, i32) {
    %c0_i32 = arith.constant 0 : i32
    %c0_i32_0 = arith.constant 0 : i32
    return %arg0, %c0_i32 : i32, i32
  }
  func.func @transform_2(%arg0: i32) -> (i32, i32) {
    %c0_i32 = arith.constant 0 : i32
    %c0_i32_0 = arith.constant 0 : i32
    %c0_i32_1 = arith.constant 0 : i32
    return %c0_i32, %c0_i32_0 : i32, i32
  }
  func.func @transform_3(%arg0: i32) -> (i32, i32) {
    %c0_i32 = arith.constant 0 : i32
    %c0_i32_0 = arith.constant 0 : i32
    %c0_i32_1 = arith.constant 0 : i32
    return %c0_i32, %c0_i32_0 : i32, i32
  }
  func.func @transform_4(%arg0: i32) -> (i32, i32) {
    %c0_i32 = arith.constant 0 : i32
    %c0_i32_0 = arith.constant 0 : i32
    %c0_i32_1 = arith.constant 0 : i32
    return %c0_i32, %c0_i32_0 : i32, i32
  }
  func.func @transform_5(%arg0: i32) -> (i32, i32) {
    %c0_i32 = arith.constant 0 : i32
    %c0_i32_0 = arith.constant 0 : i32
    %c0_i32_1 = arith.constant 0 : i32
    return %c0_i32, %c0_i32_0 : i32, i32
  }
  func.func @transform_6(%arg0: i32) -> (i32, i32) {
    %c0_i32 = arith.constant 0 : i32
    %c0_i32_0 = arith.constant 0 : i32
    return %arg0, %c0_i32 : i32, i32
  }
}

module attributes {stable_mosaic.version = 11 : i64} {
  func.func @bert_self_output_kernel(%arg0: i32, %arg1: memref<8x32xf32, #tpu.memory_space<vmem>>, %arg2: memref<8x32xf32, #tpu.memory_space<vmem>>, %arg3: memref<32x32xf32, #tpu.memory_space<vmem>>, %arg4: memref<1x32xf32, #tpu.memory_space<vmem>>, %arg5: memref<1x32xf32, #tpu.memory_space<vmem>>, %arg6: memref<1x32xf32, #tpu.memory_space<vmem>>, %arg7: memref<8x32xf32, #tpu.memory_space<vmem>>) attributes {dimension_semantics = [#tpu.dimension_semantics<parallel>], iteration_bounds = array<i64: 2>, scalar_prefetch = 0 : i64, scratch_operands = 0 : i64, tpu.core_type = #tpu.core_type<tc>, window_params = [{transform_indices = @transform_0, window_bounds = array<i64: 8, 32>}, {transform_indices = @transform_1, window_bounds = array<i64: 8, 32>}, {pipeline_mode = #tpu.pipeline_mode<synchronous>, transform_indices = @transform_2, window_bounds = array<i64: 32, 32>}, {pipeline_mode = #tpu.pipeline_mode<synchronous>, transform_indices = @transform_3, window_bounds = array<i64: 1, 32>}, {pipeline_mode = #tpu.pipeline_mode<synchronous>, transform_indices = @transform_4, window_bounds = array<i64: 1, 32>}, {pipeline_mode = #tpu.pipeline_mode<synchronous>, transform_indices = @transform_5, window_bounds = array<i64: 1, 32>}, {transform_indices = @transform_6, window_bounds = array<i64: 8, 32>}]} {
    %c0 = arith.constant 0 : index
    %c0_0 = arith.constant 0 : index
    %0 = vector.load %arg1[%c0, %c0_0] : memref<8x32xf32, #tpu.memory_space<vmem>>, vector<8x32xf32>
    %c0_1 = arith.constant 0 : index
    %c0_2 = arith.constant 0 : index
    %1 = vector.load %arg3[%c0_1, %c0_2] : memref<32x32xf32, #tpu.memory_space<vmem>>, vector<32x32xf32>
    %cst = arith.constant dense<0.000000e+00> : vector<8x32xf32>
    %2 = tpu.matmul %0, %1, %cst {dimension_numbers = #tpu.dot_dimension_numbers<[1], [0], [0], [1], [0, 0, 1, 1], [], []>} : vector<8x32xf32>, vector<32x32xf32>, vector<8x32xf32> -> vector<8x32xf32>
    %c0_3 = arith.constant 0 : index
    %c0_4 = arith.constant 0 : index
    %3 = vector.load %arg4[%c0_3, %c0_4] : memref<1x32xf32, #tpu.memory_space<vmem>>, vector<1x32xf32>
    %4 = vector.broadcast %3 : vector<1x32xf32> to vector<8x32xf32>
    %5 = arith.addf %2, %4 : vector<8x32xf32>
    %c0_5 = arith.constant 0 : index
    %c0_6 = arith.constant 0 : index
    %6 = vector.load %arg2[%c0_5, %c0_6] : memref<8x32xf32, #tpu.memory_space<vmem>>, vector<8x32xf32>
    %7 = arith.addf %5, %6 : vector<8x32xf32>
    %cst_7 = arith.constant dense<0.000000e+00> : vector<8xf32>
    %8 = vector.multi_reduction <add>, %7, %cst_7 [1] : vector<8x32xf32> to vector<8xf32>
    %9 = vector.shape_cast %8 : vector<8xf32> to vector<8x1xf32>
    %cst_8 = arith.constant 3.125000e-02 : f32
    %10 = vector.broadcast %cst_8 : f32 to vector<8x1xf32>
    %11 = arith.mulf %9, %10 : vector<8x1xf32>
    %12 = arith.mulf %7, %7 : vector<8x32xf32>
    %cst_9 = arith.constant dense<0.000000e+00> : vector<8xf32>
    %13 = vector.multi_reduction <add>, %12, %cst_9 [1] : vector<8x32xf32> to vector<8xf32>
    %14 = vector.shape_cast %13 : vector<8xf32> to vector<8x1xf32>
    %cst_10 = arith.constant 3.125000e-02 : f32
    %15 = vector.broadcast %cst_10 : f32 to vector<8x1xf32>
    %16 = arith.mulf %14, %15 : vector<8x1xf32>
    %17 = arith.mulf %11, %11 : vector<8x1xf32>
    %18 = arith.subf %16, %17 : vector<8x1xf32>
    %cst_11 = arith.constant 9.99999974E-6 : f32
    %19 = vector.broadcast %cst_11 : f32 to vector<8x1xf32>
    %20 = arith.addf %18, %19 : vector<8x1xf32>
    %21 = math.rsqrt %20 : vector<8x1xf32>
    %22 = vector.broadcast %11 : vector<8x1xf32> to vector<8x32xf32>
    %23 = arith.subf %7, %22 : vector<8x32xf32>
    %24 = vector.broadcast %21 : vector<8x1xf32> to vector<8x32xf32>
    %25 = arith.mulf %23, %24 : vector<8x32xf32>
    %c0_12 = arith.constant 0 : index
    %c0_13 = arith.constant 0 : index
    %26 = vector.load %arg5[%c0_12, %c0_13] : memref<1x32xf32, #tpu.memory_space<vmem>>, vector<1x32xf32>
    %27 = vector.broadcast %26 : vector<1x32xf32> to vector<8x32xf32>
    %28 = arith.mulf %25, %27 : vector<8x32xf32>
    %c0_14 = arith.constant 0 : index
    %c0_15 = arith.constant 0 : index
    %29 = vector.load %arg6[%c0_14, %c0_15] : memref<1x32xf32, #tpu.memory_space<vmem>>, vector<1x32xf32>
    %30 = vector.broadcast %29 : vector<1x32xf32> to vector<8x32xf32>
    %31 = arith.addf %28, %30 : vector<8x32xf32>
    %c0_16 = arith.constant 0 : index
    %c0_17 = arith.constant 0 : index
    %32 = vector.load %arg7[%c0_16, %c0_17] : memref<8x32xf32, #tpu.memory_space<vmem>>, vector<8x32xf32>
    tpu.vector_store %arg7[%c0_16, %c0_17], %31 {strides = array<i32>} : memref<8x32xf32, #tpu.memory_space<vmem>>, vector<8x32xf32>,
    return
  }
  func.func @transform_0(%arg0: i32) -> (i32, i32) {
    %c0_i32 = arith.constant 0 : i32
    %c0_i32_0 = arith.constant 0 : i32
    return %arg0, %c0_i32 : i32, i32
  }
  func.func @transform_1(%arg0: i32) -> (i32, i32) {
    %c0_i32 = arith.constant 0 : i32
    %c0_i32_0 = arith.constant 0 : i32
    return %arg0, %c0_i32 : i32, i32
  }
  func.func @transform_2(%arg0: i32) -> (i32, i32) {
    %c0_i32 = arith.constant 0 : i32
    %c0_i32_0 = arith.constant 0 : i32
    %c0_i32_1 = arith.constant 0 : i32
    return %c0_i32, %c0_i32_0 : i32, i32
  }
  func.func @transform_3(%arg0: i32) -> (i32, i32) {
    %c0_i32 = arith.constant 0 : i32
    %c0_i32_0 = arith.constant 0 : i32
    %c0_i32_1 = arith.constant 0 : i32
    return %c0_i32, %c0_i32_0 : i32, i32
  }
  func.func @transform_4(%arg0: i32) -> (i32, i32) {
    %c0_i32 = arith.constant 0 : i32
    %c0_i32_0 = arith.constant 0 : i32
    %c0_i32_1 = arith.constant 0 : i32
    return %c0_i32, %c0_i32_0 : i32, i32
  }
  func.func @transform_5(%arg0: i32) -> (i32, i32) {
    %c0_i32 = arith.constant 0 : i32
    %c0_i32_0 = arith.constant 0 : i32
    %c0_i32_1 = arith.constant 0 : i32
    return %c0_i32, %c0_i32_0 : i32, i32
  }
  func.func @transform_6(%arg0: i32) -> (i32, i32) {
    %c0_i32 = arith.constant 0 : i32
    %c0_i32_0 = arith.constant 0 : i32
    return %arg0, %c0_i32 : i32, i32
  }
}

</mosaic_0001>

<llo_original>
// kernel: tpu_custom_call.1
$region0: #{tpu_custom_call.1}
  #allocation0 [shape = 'u32[]', space=smem, size = 0x4, offset = 0x4, fixed_abs, tag = 'smem constant byte address 0x4 - core index']
  #allocation1 [shape = 'u32[144,128]{1,0:T(1,128)}', space=vmem, size = 0x12000, scoped, tag = 'internal scratch']
  %s0 = inlined_call_operand.hbm [shape: f32[16,32], index: 0, kind: input, shape index: {}]
  %s1 = inlined_call_operand.hbm [shape: f32[16,32], index: 1, kind: input, shape index: {}]
  %s2 = inlined_call_operand.hbm [shape: f32[32,32], index: 2, kind: input, shape index: {}]
  %s3 = inlined_call_operand.vmem [shape: f32[1,32], index: 3, kind: input, shape index: {}]
  %s4 = inlined_call_operand.vmem [shape: f32[1,32], index: 4, kind: input, shape index: {}]
  %s5 = inlined_call_operand.vmem [shape: f32[1,32], index: 5, kind: input, shape index: {}]
  %s6 = inlined_call_operand.hbm [shape: f32[16,32], index: 6, kind: output, shape index: {}]
  %s7 = sld [smem:[#allocation0]]
  $region69: #{tpu_custom_call.1} parent=0
    _
  %s9 = ssub.s32 1, %s7
  %s10 = scalar_select 0, %s9, %s7
  $region1: #{tpu_custom_call.1} parent=0
    #allocation2 [shape = 'u8[8192]{0}', space=vmem, size = 0x2000, scoped, tag = 'input window, operand 0']
    #allocation3 [shape = 's32[2]{0}', space=sflag, size = 0x8, scoped, tag = 'scoped memory for tpu_custom_call.1']
    #allocation4 [shape = 's32[2]{0}', space=sflag, size = 0x8, scoped, tag = 'scoped memory for tpu_custom_call.1']
    #allocation5 [shape = 'u8[8192]{0}', space=vmem, size = 0x2000, scoped, tag = 'input window, operand 1']
    #allocation6 [shape = 's32[2]{0}', space=sflag, size = 0x8, scoped, tag = 'scoped memory for tpu_custom_call.1']
    #allocation7 [shape = 'u8[16384]{0}', space=vmem, size = 0x4000, scoped, tag = 'input window, operand 2, single buffered']
    #allocation8 [shape = 'u8[8192]{0}', space=vmem, size = 0x2000, scoped, tag = 'output window, operand 0']
    %11 = vsyncpa [#allocation3], 0
    %s12 = scalar_lea.sflag [#allocation3], 1
    %13 = vsyncpa %s12, 0
    %14 = vsyncpa [#allocation6], 0
    %s15 = scalar_lea.sflag [#allocation6], 1
    %16 = vsyncpa %s15, 0
    %17 = vsyncpa [#allocation4], 0
    %s18 = scalar_lea.sflag [#allocation4], 1
    %19 = vsyncpa %s18, 0
    loop: start=0, step=1, limit=4
    $region2: #{tpu_custom_call.1} parent=1 // loop_pre_header
      _
    $region3: #{tpu_custom_call.1} parent=1 // loop_header
      %s21 = sphi 0, %s25
      %p22 = scmp.ge.s32.totalorder %s21, 4
      %s31 = sphi 0, %s33
      %s34 = sphi 0, %s31
      %s35 = sphi 0, %s34
      %s51 = sphi 0, %s35
      %s57 = sphi 0, %s59
      %s60 = sphi 0, %s57
      %s61 = sphi 0, %s60
      %s77 = sphi 0, %s61
      %s81 = sphi 0, %s81
      %s83 = sphi 0, %s81
      %s84 = sphi 0, %s83
      %s98 = sphi 0, %s84
      %s102 = sphi 0, %s102
      %s104 = sphi 0, %s102
      %s105 = sphi 0, %s104
      %s119 = sphi 0, %s105
      %s123 = sphi 0, %s123
      %s125 = sphi 0, %s123
      %s126 = sphi 0, %s125
      %s140 = sphi 0, %s126
      %s144 = sphi 0, %s144
      %s146 = sphi 0, %s144
      %s147 = sphi 0, %s146
      %s161 = sphi 0, %s147
      %s167 = sphi 0, %s169
      %s170 = sphi 0, %s167
      %s171 = sphi 0, %s170
      %s187 = sphi 0, %s171
    $region4: #{tpu_custom_call.1} parent=1 // loop_header_branch
      %24 = sbr.rel (%p22) target = $region8
    $region5: #{tpu_custom_call.1} parent=1 // loop_body
      %s26 = ssub.s32 %s21, 1
      %s27 = ssub.s32 %s21, 2
      %s28 = sadd.s32 %s21, 1
      %s29 = ssub.s32 %s21, %s28
      %p30 = scmp.eq.s32.totalorder %s29, 0
      %s32 = sadd.s32 %s31, 1
      %s33 = scalar_select %p30, %s31, %s32
      %p36 = pneg %p30
      %p37 = scmp.eq.s32.totalorder %s21, 1
      %p38 = por %p36, %p37
      %p39 = scmp.ne.s32.totalorder %s31, %s34
      %p40 = scmp.eq.s32.totalorder %s21, 0
      %p41 = por %p39, %p40
      %p42 = scmp.ne.s32.totalorder %s31, %s34
      %p43 = scmp.eq.s32.totalorder %s26, 1
      %p44 = por %p42, %p43
      %p45 = scmp.ne.s32.totalorder %s34, %s35
      %p46 = scmp.eq.s32.totalorder %s26, 0
      %p47 = por %p45, %p46
      %p48 = scmp.ne.s32.totalorder %s34, %s35
      %p49 = scmp.eq.s32.totalorder %s27, 1
      %p50 = por %p48, %p49
      %p52 = scmp.ne.s32.totalorder %s35, %s51
      %p53 = scmp.eq.s32.totalorder %s27, 0
      %p54 = por %p52, %p53
      %s55 = ssub.s32 %s21, %s28
      %p56 = scmp.eq.s32.totalorder %s55, 0
      %s58 = sadd.s32 %s57, 1
      %s59 = scalar_select %p56, %s57, %s58
      %p62 = pneg %p56
      %p63 = scmp.eq.s32.totalorder %s21, 1
      %p64 = por %p62, %p63
      %p65 = scmp.ne.s32.totalorder %s57, %s60
      %p66 = scmp.eq.s32.totalorder %s21, 0
      %p67 = por %p65, %p66
      %p68 = scmp.ne.s32.totalorder %s57, %s60
      %p69 = scmp.eq.s32.totalorder %s26, 1
      %p70 = por %p68, %p69
      %p71 = scmp.ne.s32.totalorder %s60, %s61
      %p72 = scmp.eq.s32.totalorder %s26, 0
      %p73 = por %p71, %p72
      %p74 = scmp.ne.s32.totalorder %s60, %s61
      %p75 = scmp.eq.s32.totalorder %s27, 1
      %p76 = por %p74, %p75
      %p78 = scmp.ne.s32.totalorder %s61, %s77
      %p79 = scmp.eq.s32.totalorder %s27, 0
      %p80 = por %p78, %p79
      %s82 = sadd.s32 %s81, 1
      %p85 = scmp.eq.s32.totalorder %s21, 1
      %p86 = scmp.ne.s32.totalorder %s81, %s83
      %p87 = scmp.eq.s32.totalorder %s21, 0
      %p88 = por %p86, %p87
      %p89 = scmp.ne.s32.totalorder %s81, %s83
      %p90 = scmp.eq.s32.totalorder %s26, 1
      %p91 = por %p89, %p90
      %p92 = scmp.ne.s32.totalorder %s83, %s84
      %p93 = scmp.eq.s32.totalorder %s26, 0
      %p94 = por %p92, %p93
      %p95 = scmp.ne.s32.totalorder %s83, %s84
      %p96 = scmp.eq.s32.totalorder %s27, 1
      %p97 = por %p95, %p96
      %p99 = scmp.ne.s32.totalorder %s84, %s98
      %p100 = scmp.eq.s32.totalorder %s27, 0
      %p101 = por %p99, %p100
      %s103 = sadd.s32 %s102, 1
      %p106 = scmp.eq.s32.totalorder %s21, 1
      %p107 = scmp.ne.s32.totalorder %s102, %s104
      %p108 = scmp.eq.s32.totalorder %s21, 0
      %p109 = por %p107, %p108
      %p110 = scmp.ne.s32.totalorder %s102, %s104
      %p111 = scmp.eq.s32.totalorder %s26, 1
      %p112 = por %p110, %p111
      %p113 = scmp.ne.s32.totalorder %s104, %s105
      %p114 = scmp.eq.s32.totalorder %s26, 0
      %p115 = por %p113, %p114
      %p116 = scmp.ne.s32.totalorder %s104, %s105
      %p117 = scmp.eq.s32.totalorder %s27, 1
      %p118 = por %p116, %p117
      %p120 = scmp.ne.s32.totalorder %s105, %s119
      %p121 = scmp.eq.s32.totalorder %s27, 0
      %p122 = por %p120, %p121
      %s124 = sadd.s32 %s123, 1
      %p127 = scmp.eq.s32.totalorder %s21, 1
      %p128 = scmp.ne.s32.totalorder %s123, %s125
      %p129 = scmp.eq.s32.totalorder %s21, 0
      %p130 = por %p128, %p129
      %p131 = scmp.ne.s32.totalorder %s123, %s125
      %p132 = scmp.eq.s32.totalorder %s26, 1
      %p133 = por %p131, %p132
      %p134 = scmp.ne.s32.totalorder %s125, %s126
      %p135 = scmp.eq.s32.totalorder %s26, 0
      %p136 = por %p134, %p135
      %p137 = scmp.ne.s32.totalorder %s125, %s126
      %p138 = scmp.eq.s32.totalorder %s27, 1
      %p139 = por %p137, %p138
      %p141 = scmp.ne.s32.totalorder %s126, %s140
      %p142 = scmp.eq.s32.totalorder %s27, 0
      %p143 = por %p141, %p142
      %s145 = sadd.s32 %s144, 1
      %p148 = scmp.eq.s32.totalorder %s21, 1
      %p149 = scmp.ne.s32.totalorder %s144, %s146
      %p150 = scmp.eq.s32.totalorder %s21, 0
      %p151 = por %p149, %p150
      %p152 = scmp.ne.s32.totalorder %s144, %s146
      %p153 = scmp.eq.s32.totalorder %s26, 1
      %p154 = por %p152, %p153
      %p155 = scmp.ne.s32.totalorder %s146, %s147
      %p156 = scmp.eq.s32.totalorder %s26, 0
      %p157 = por %p155, %p156
      %p158 = scmp.ne.s32.totalorder %s146, %s147
      %p159 = scmp.eq.s32.totalorder %s27, 1
      %p160 = por %p158, %p159
      %p162 = scmp.ne.s32.totalorder %s147, %s161
      %p163 = scmp.eq.s32.totalorder %s27, 0
      %p164 = por %p162, %p163
      %s165 = ssub.s32 %s21, %s28
      %p166 = scmp.eq.s32.totalorder %s165, 0
      %s168 = sadd.s32 %s167, 1
      %s169 = scalar_select %p166, %s167, %s168
      %p172 = pneg %p166
      %p173 = scmp.eq.s32.totalorder %s21, 1
      %p174 = por %p172, %p173
      %p175 = scmp.ne.s32.totalorder %s167, %s170
      %p176 = scmp.eq.s32.totalorder %s21, 0
      %p177 = por %p175, %p176
      %p178 = scmp.ne.s32.totalorder %s167, %s170
      %p179 = scmp.eq.s32.totalorder %s26, 1
      %p180 = por %p178, %p179
      %p181 = scmp.ne.s32.totalorder %s170, %s171
      %p182 = scmp.eq.s32.totalorder %s26, 0
      %p183 = por %p181, %p182
      %p184 = scmp.ne.s32.totalorder %s170, %s171
      %p185 = scmp.eq.s32.totalorder %s27, 1
      %p186 = por %p184, %p185
      %p188 = scmp.ne.s32.totalorder %s171, %s187
      %p189 = scmp.eq.s32.totalorder %s27, 0
      %p190 = por %p188, %p189
      %p191 = scmp.le.s32.totalorder 1, %s21
      %p192 = scmp.lt.s32.totalorder %s21, 3
      %p193 = pnand %p191, %p192
      %p194 = pneg %p193
      // Predicated region
      $region9: #{tpu_custom_call.1} parent=5 // pred_check
        _
      $region10: #{tpu_custom_call.1} parent=5 // pred_check_branch
        %196 = sbr.rel (%p193) target = $region12
      $region11: #{tpu_custom_call.1} parent=5 // pred_region
        %s197 = ssub.s32 %s21, 1
        // Predicated region
        $region13: #{tpu_custom_call.1} parent=11 // pred_check
          %p198 = pneg %p94
        $region14: #{tpu_custom_call.1} parent=11 // pred_check_branch
          %200 = sbr.rel (%p198) target = $region16
        $region15: #{tpu_custom_call.1} parent=11 // pred_region
          %s202 = ssub.s32 512, 512
          %203 = vsyncadd [#allocation6], %s202
          %s204 = sshll.u32 [#allocation7], 4
          %s205 = int_to_ptr.vmem [resolvable:$true] %s204
          %210 = dma.hbm_to_vmem [thread:$0]  %s2, 512, %s205, [#allocation6], 128, 128, 8
        $region16: #{tpu_custom_call.1} parent=11 // pred_fallthru
          _
        // Predicated region
        $region17: #{tpu_custom_call.1} parent=11 // pred_check
          %p211 = pneg %p115
        $region18: #{tpu_custom_call.1} parent=11 // pred_check_branch
          %213 = sbr.rel (%p211) target = $region20
        $region19: #{tpu_custom_call.1} parent=11 // pred_region
          _
        $region20: #{tpu_custom_call.1} parent=11 // pred_fallthru
          _
        // Predicated region
        $region21: #{tpu_custom_call.1} parent=11 // pred_check
          %p214 = pneg %p136
        $region22: #{tpu_custom_call.1} parent=11 // pred_check_branch
          %216 = sbr.rel (%p214) target = $region24
        $region23: #{tpu_custom_call.1} parent=11 // pred_region
          _
        $region24: #{tpu_custom_call.1} parent=11 // pred_fallthru
          _
        // Predicated region
        $region25: #{tpu_custom_call.1} parent=11 // pred_check
          %p217 = pneg %p157
        $region26: #{tpu_custom_call.1} parent=11 // pred_check_branch
          %219 = sbr.rel (%p217) target = $region28
        $region27: #{tpu_custom_call.1} parent=11 // pred_region
          _
        $region28: #{tpu_custom_call.1} parent=11 // pred_fallthru
          _
      $region12: #{tpu_custom_call.1} parent=5 // pred_fallthru
        _
      %p220 = scmp.lt.s32.totalorder %s21, 2
      // Predicated region
      $region29: #{tpu_custom_call.1} parent=5 // pred_check
        %p221 = pneg %p220
      $region30: #{tpu_custom_call.1} parent=5 // pred_check_branch
        %223 = sbr.rel (%p221) target = $region32
      $region31: #{tpu_custom_call.1} parent=5 // pred_region
        // Predicated region
        $region33: #{tpu_custom_call.1} parent=31 // pred_check
          %p224 = pneg %p41
        $region34: #{tpu_custom_call.1} parent=31 // pred_check_branch
          %226 = sbr.rel (%p224) target = $region36
        $region35: #{tpu_custom_call.1} parent=31 // pred_region
          %s227 = sand.u32 %s31, 1
          %s228 = scalar_lea.sflag [#allocation3], %s227
          %s229 = sand.u32 %s31, 1
          %s230 = smul.addr %s229, 8
          %s231 = scalar_lea.vmem [#allocation2], %s230
          %s233 = ssub.s32 128, 128
          %234 = vsyncadd %s228, %s233
          %s235 = smul.addr %s21, 128
          %s236 = scalar_lea.hbm %s0, %s235
          %s238 = sshll.u32 %s231, 4
          %s239 = int_to_ptr.vmem [resolvable:$true] %s238
          %241 = dma.hbm_to_vmem [thread:$0]  %s236, 128, %s239, %s228
        $region36: #{tpu_custom_call.1} parent=31 // pred_fallthru
          _
        // Predicated region
        $region37: #{tpu_custom_call.1} parent=31 // pred_check
          %p242 = pneg %p67
        $region38: #{tpu_custom_call.1} parent=31 // pred_check_branch
          %244 = sbr.rel (%p242) target = $region40
        $region39: #{tpu_custom_call.1} parent=31 // pred_region
          %s245 = sand.u32 %s21, 1
          %s246 = scalar_lea.sflag [#allocation6], %s245
          %s247 = sand.u32 %s57, 1
          %s248 = smul.addr %s247, 8
          %s249 = scalar_lea.vmem [#allocation5], %s248
          %s251 = ssub.s32 128, 128
          %252 = vsyncadd %s246, %s251
          %s253 = smul.addr %s21, 128
          %s254 = scalar_lea.hbm %s1, %s253
          %s256 = sshll.u32 %s249, 4
          %s257 = int_to_ptr.vmem [resolvable:$true] %s256
          %259 = dma.hbm_to_vmem [thread:$0]  %s254, 128, %s257, %s246
        $region40: #{tpu_custom_call.1} parent=31 // pred_fallthru
          _
      $region32: #{tpu_custom_call.1} parent=5 // pred_fallthru
        _
      %p260 = scmp.le.s32.totalorder 1, %s21
      %p261 = scmp.lt.s32.totalorder %s21, 3
      %p262 = pnand %p260, %p261
      %p263 = pneg %p262
      // Predicated region
      $region41: #{tpu_custom_call.1} parent=5 // pred_check
        _
      $region42: #{tpu_custom_call.1} parent=5 // pred_check_branch
        %265 = sbr.rel (%p262) target = $region44
      $region43: #{tpu_custom_call.1} parent=5 // pred_region
        %s266 = ssub.s32 %s21, 1
        %s267 = sand.u32 %s34, 1
        %s268 = scalar_lea.sflag [#allocation3], %s267
        %s269 = sand.u32 %s34, 1
        %s270 = smul.addr %s269, 8
        %s271 = scalar_lea.vmem [#allocation2], %s270
        // Predicated region
        $region45: #{tpu_custom_call.1} parent=43 // pred_check
          %p272 = pneg %p47
        $region46: #{tpu_custom_call.1} parent=43 // pred_check_branch
          %274 = sbr.rel (%p272) target = $region48
        $region47: #{tpu_custom_call.1} parent=43 // pred_region
          %275 = dma.done %s268, 128
        $region48: #{tpu_custom_call.1} parent=43 // pred_fallthru
          _
        %s276 = sand.u32 %s26, 1
        %s277 = scalar_lea.sflag [#allocation6], %s276
        %s278 = sand.u32 %s60, 1
        %s279 = smul.addr %s278, 8
        %s280 = scalar_lea.vmem [#allocation5], %s279
        // Predicated region
        $region49: #{tpu_custom_call.1} parent=43 // pred_check
          %p281 = pneg %p73
        $region50: #{tpu_custom_call.1} parent=43 // pred_check_branch
          %283 = sbr.rel (%p281) target = $region52
        $region51: #{tpu_custom_call.1} parent=43 // pred_region
          %284 = dma.done %s277, 128
        $region52: #{tpu_custom_call.1} parent=43 // pred_fallthru
          _
        // Predicated region
        $region53: #{tpu_custom_call.1} parent=43 // pred_check
          %p285 = pneg %p94
        $region54: #{tpu_custom_call.1} parent=43 // pred_check_branch
          %287 = sbr.rel (%p285) target = $region56
        $region55: #{tpu_custom_call.1} parent=43 // pred_region
          %288 = dma.done [#allocation6], 512
        $region56: #{tpu_custom_call.1} parent=43 // pred_fallthru
          _
        %s289 = sand.u32 %s34, 1
        %s290 = scalar_lea.sflag [#allocation3], %s289
        %s291 = sand.u32 %s34, 1
        %s292 = smul.addr %s291, 8
        %s293 = scalar_lea.vmem [#allocation2], %s292
        %p294 = pneg %p47
        %p295 = pneg %p44
        %s296 = sand.u32 %s26, 1
        %s297 = scalar_lea.sflag [#allocation6], %s296
        %s298 = sand.u32 %s60, 1
        %s299 = smul.addr %s298, 8
        %s300 = scalar_lea.vmem [#allocation5], %s299
        %p301 = pneg %p73
        %p302 = pneg %p70
        %p303 = pneg %p94
        %p304 = pneg %p91
        %p305 = pneg %p115
        %p306 = pneg %p112
        %p307 = pneg %p136
        %p308 = pneg %p133
        %p309 = pneg %p157
        %p310 = pneg %p154
        %p311 = pneg %p183
        %p312 = pneg %p180
        %s313 = sand.u32 %s170, 1
        %s314 = scalar_lea.sflag [#allocation4], %s313
        %s315 = sand.u32 %s170, 1
        %s316 = smul.addr %s315, 8
        %s317 = scalar_lea.vmem [#allocation8], %s316
        %v318 = vld [vmem:[%s271] sm:$0xff]
        %v319 = vld [vmem:[#allocation7] sm:$0xff]
        %v320 = vld [vmem:[#allocation7 + $0x8] sm:$0xff]
        %v321 = vld [vmem:[#allocation7 + $0x10] sm:$0xff]
        %v322 = vld [vmem:[#allocation7 + $0x18] sm:$0xff]
        %v323 = vld [vmem:[%s3] sm:$0x1]
        %v325 = vlaneseq
        %v326 = vshrl.u32 %v325, 7
        %v327 = vsub.s32 0, %v326
        %v328 = vrot.slane %v323, %v327
        %vm330 = vcmask 261120
        %v332 = vsel %vm330, %v318, 0
        %334 = vmatprep.subr.mxu0 0.0
        %335 = vmatpush1.msra.mxu0 0.0
        %336 = vmatprep.subr.mxu0 0.0
        %337 = vmatpush1.msra.mxu0 0.0
        %338 = vmatprep.subr.mxu0 0.0
        %339 = vmatpush1.msra.mxu0 0.0
        %340 = vmatprep.subr.mxu0 0.0
        %341 = vmatpush1.msra.mxu0 0.0
        %342 = vmatprep.subr.mxu0 0.0
        %343 = vmatpush1.msra.mxu0 0.0
        %344 = vmatprep.subr.mxu0 0.0
        %345 = vmatpush1.msra.mxu0 0.0
        %346 = vmatprep.subr.mxu0 0.0
        %347 = vmatpush1.msra.mxu0 0.0
        %348 = vmatprep.subr.mxu0 0.0
        %349 = vmatpush1.msra.mxu0 0.0
        %350 = vmatprep.subr.mxu0 0.0
        %351 = vmatpush1.msra.mxu0 0.0
        %352 = vmatprep.subr.mxu0 0.0
        %353 = vmatpush1.msra.mxu0 0.0
        %354 = vmatprep.subr.mxu0 0.0
        %355 = vmatpush1.msra.mxu0 0.0
        %356 = vmatprep.subr.mxu0 0.0
        %357 = vmatpush1.msra.mxu0 0.0
        %358 = vmatprep.subr.mxu0 0.0
        %359 = vmatpush1.msra.mxu0 %v322
        %360 = vmatprep.subr.mxu0 0.0
        %361 = vmatpush1.msra.mxu0 %v321
        %362 = vmatprep.subr.mxu0 0.0
        %363 = vmatpush1.msra.mxu0 %v320
        %364 = vmatprep.subr.mxu0 0.0
        %365 = vmatpush1.msra.mxu0 %v319
        %366 = vmatprep.subr.mxu0 0.0
        %367 = vmatpush2.msra.mxu0 0.0
        %368 = vmatprep.subr.mxu0 0.0
        %369 = vmatpush2.msra.mxu0 0.0
        %370 = vmatprep.subr.mxu0 0.0
        %371 = vmatpush2.msra.mxu0 0.0
        %372 = vmatprep.subr.mxu0 0.0
        %373 = vmatpush2.msra.mxu0 0.0
        %374 = vmatprep.subr.mxu0 0.0
        %375 = vmatpush2.msra.mxu0 0.0
        %376 = vmatprep.subr.mxu0 0.0
        %377 = vmatpush2.msra.mxu0 0.0
        %378 = vmatprep.subr.mxu0 0.0
        %379 = vmatpush2.msra.mxu0 0.0
        %380 = vmatprep.subr.mxu0 0.0
        %381 = vmatpush2.msra.mxu0 0.0
        %382 = vmatprep.subr.mxu0 0.0
        %383 = vmatpush2.msra.mxu0 0.0
        %384 = vmatprep.subr.mxu0 0.0
        %385 = vmatpush2.msra.mxu0 0.0
        %386 = vmatprep.subr.mxu0 0.0
        %387 = vmatpush2.msra.mxu0 0.0
        %388 = vmatprep.subr.mxu0 0.0
        %389 = vmatpush2.msra.mxu0 0.0
        %390 = vmatprep.subr.mxu0 0.0
        %391 = vmatpush2.msra.mxu0 0.0
        %392 = vmatprep.subr.mxu0 0.0
        %393 = vmatpush2.msra.mxu0 0.0
        %394 = vmatprep.subr.mxu0 0.0
        %395 = vmatpush2.msra.mxu0 0.0
        %396 = vmatprep.subr.mxu0 0.0
        %397 = vmatpush2.msra.mxu0 0.0
        %398 = vmatprep.mubr.f32.mxu0 0.0
        %399 = vmatmul.mubr.f32.gmra.mxu0 %v332
        %v400 = vpop.f32.mrf.mxu0
        %v401 = vadd.f32 %v328, %v400
        %v402 = vpop.f32.mrf.mxu0
        %403 = vdwg.mxu0
        %v404 = vld [vmem:[%s280] sm:$0xff]
        %v405 = vadd.f32 %v401, %v404
        %v406 = vsel %vm330, %v405, 0.0
        %407 = vadd.xlane.f32.xlu0 %v406
        %v408 = vpop.xlane.xlu0 %407
        %v409 = vmul.f32 %v408, 0.03125
        %v410 = vmul.f32 %v405, %v405
        %v411 = vsel %vm330, %v410, 0.0
        %412 = vadd.xlane.f32.xlu0 %v411
        %v413 = vpop.xlane.xlu0 %412
        %v414 = vmul.f32 %v413, 0.03125
        %v415 = vmul.f32 %v409, %v409
        %v416 = vsub.f32 %v414, %v415
        %v417 = vadd.f32 %v416, 1e-05
        %v418 = vrsqrt.pop %v417
        %v419 = vsub.f32 %v405, %v409
        %v420 = vmul.f32 %v419, %v418
        %v421 = vld [vmem:[%s4] sm:$0x1]
        %v423 = vlaneseq
        %v424 = vshrl.u32 %v423, 7
        %v425 = vsub.s32 0, %v424
        %v426 = vrot.slane %v421, %v425
        %v428 = vmul.f32 %v420, %v426
        %v429 = vld [vmem:[%s5] sm:$0x1]
        %v431 = vlaneseq
        %v432 = vshrl.u32 %v431, 7
        %v433 = vsub.s32 0, %v432
        %v434 = vrot.slane %v429, %v433
        %v436 = vadd.f32 %v428, %v434
        %437 = vst.msk [vmem:[%s317] sm:$0xff] %vm330, %v436
        %s438 = sand.u32 %s170, 1
        %s439 = scalar_lea.sflag [#allocation4], %s438
        %s440 = sand.u32 %s170, 1
        %s441 = smul.addr %s440, 8
        %s442 = scalar_lea.vmem [#allocation8], %s441
        // Predicated region
        $region57: #{tpu_custom_call.1} parent=43 // pred_check
          %p443 = pneg %p180
        $region58: #{tpu_custom_call.1} parent=43 // pred_check_branch
          %445 = sbr.rel (%p443) target = $region60
        $region59: #{tpu_custom_call.1} parent=43 // pred_region
          %s447 = ssub.s32 128, 128
          %448 = vsyncadd %s439, %s447
          %s449 = smul.addr %s26, 128
          %s450 = scalar_lea.hbm %s6, %s449
          %s452 = sshll.u32 %s442, 4
          %s453 = int_to_ptr.vmem [resolvable:$true] %s452
          %455 = dma.vmem_to_hbm [thread:$0]  %s453, 128, %s450, %s439
        $region60: #{tpu_custom_call.1} parent=43 // pred_fallthru
          _
      $region44: #{tpu_custom_call.1} parent=5 // pred_fallthru
        _
      %p456 = scmp.le.s32.totalorder 2, %s21
      // Predicated region
      $region61: #{tpu_custom_call.1} parent=5 // pred_check
        %p457 = pneg %p456
      $region62: #{tpu_custom_call.1} parent=5 // pred_check_branch
        %459 = sbr.rel (%p457) target = $region64
      $region63: #{tpu_custom_call.1} parent=5 // pred_region
        %s460 = ssub.s32 %s21, 2
        // Predicated region
        $region65: #{tpu_custom_call.1} parent=63 // pred_check
          %p461 = pneg %p186
        $region66: #{tpu_custom_call.1} parent=63 // pred_check_branch
          %463 = sbr.rel (%p461) target = $region68
        $region67: #{tpu_custom_call.1} parent=63 // pred_region
          %s464 = sand.u32 %s171, 1
          %s465 = scalar_lea.sflag [#allocation4], %s464
          %s466 = sand.u32 %s171, 1
          %s467 = smul.addr %s466, 8
          %s468 = scalar_lea.vmem [#allocation8], %s467
          %469 = dma.done %s465, 128
        $region68: #{tpu_custom_call.1} parent=63 // pred_fallthru
          _
      $region64: #{tpu_custom_call.1} parent=5 // pred_fallthru
        _
    $region6: #{tpu_custom_call.1} parent=1 // loop_footer
      %s25 = sadd.s32 1, %s21
    $region7: #{tpu_custom_call.1} parent=1 // loop_footer_branch
      %20 = sbr.rel target = $region3
    $region8: #{tpu_custom_call.1} parent=1 // loop_exit
      _
    %470 = vsyncpa [#allocation3], 1
    %s471 = scalar_lea.sflag [#allocation3], 1
    %472 = vsyncpa %s471, 1
    %473 = vsyncpa [#allocation6], 1
    %s474 = scalar_lea.sflag [#allocation6], 1
    %475 = vsyncpa %s474, 1
    %476 = vsyncpa [#allocation4], 1
    %s477 = scalar_lea.sflag [#allocation4], 1
    %478 = vsyncpa %s477, 1

// kernel: tpu_custom_call.1
$region0: #{tpu_custom_call.1}
  #allocation0 [shape = 'u32[]', space=smem, size = 0x4, offset = 0x4, fixed_abs, tag = 'smem constant byte address 0x4 - core index']
  #allocation1 [shape = 'u32[144,128]{1,0:T(1,128)}', space=vmem, size = 0x12000, scoped, tag = 'internal scratch']
  %s0 = inlined_call_operand.hbm [shape: f32[16,32], index: 0, kind: input, shape index: {}]
  %s1 = inlined_call_operand.hbm [shape: f32[16,32], index: 1, kind: input, shape index: {}]
  %s2 = inlined_call_operand.hbm [shape: f32[32,32], index: 2, kind: input, shape index: {}]
  %s3 = inlined_call_operand.vmem [shape: f32[1,32], index: 3, kind: input, shape index: {}]
  %s4 = inlined_call_operand.vmem [shape: f32[1,32], index: 4, kind: input, shape index: {}]
  %s5 = inlined_call_operand.vmem [shape: f32[1,32], index: 5, kind: input, shape index: {}]
  %s6 = inlined_call_operand.hbm [shape: f32[16,32], index: 6, kind: output, shape index: {}]
  %s7 = sld [smem:[#allocation0]]
  $region69: #{tpu_custom_call.1} parent=0
    _
  %s9 = ssub.s32 1, %s7
  %s10 = scalar_select 0, %s9, %s7
  $region1: #{tpu_custom_call.1} parent=0
    #allocation2 [shape = 'u8[8192]{0}', space=vmem, size = 0x2000, scoped, tag = 'input window, operand 0']
    #allocation3 [shape = 's32[2]{0}', space=sflag, size = 0x8, scoped, tag = 'scoped memory for tpu_custom_call.1']
    #allocation4 [shape = 's32[2]{0}', space=sflag, size = 0x8, scoped, tag = 'scoped memory for tpu_custom_call.1']
    #allocation5 [shape = 'u8[8192]{0}', space=vmem, size = 0x2000, scoped, tag = 'input window, operand 1']
    #allocation6 [shape = 's32[2]{0}', space=sflag, size = 0x8, scoped, tag = 'scoped memory for tpu_custom_call.1']
    #allocation7 [shape = 'u8[16384]{0}', space=vmem, size = 0x4000, scoped, tag = 'input window, operand 2, single buffered']
    #allocation8 [shape = 'u8[8192]{0}', space=vmem, size = 0x2000, scoped, tag = 'output window, operand 0']
    %11 = vsyncpa [#allocation3], 0
    %s12 = scalar_lea.sflag [#allocation3], 1
    %13 = vsyncpa %s12, 0
    %14 = vsyncpa [#allocation6], 0
    %s15 = scalar_lea.sflag [#allocation6], 1
    %16 = vsyncpa %s15, 0
    %17 = vsyncpa [#allocation4], 0
    %s18 = scalar_lea.sflag [#allocation4], 1
    %19 = vsyncpa %s18, 0
    loop: start=0, step=1, limit=4
    $region2: #{tpu_custom_call.1} parent=1 // loop_pre_header
      _
    $region3: #{tpu_custom_call.1} parent=1 // loop_header
      %s21 = sphi 0, %s25
      %p22 = scmp.ge.s32.totalorder %s21, 4
      %s31 = sphi 0, %s33
      %s34 = sphi 0, %s31
      %s35 = sphi 0, %s34
      %s51 = sphi 0, %s35
      %s57 = sphi 0, %s59
      %s60 = sphi 0, %s57
      %s61 = sphi 0, %s60
      %s77 = sphi 0, %s61
      %s81 = sphi 0, %s81
      %s83 = sphi 0, %s81
      %s84 = sphi 0, %s83
      %s98 = sphi 0, %s84
      %s102 = sphi 0, %s102
      %s104 = sphi 0, %s102
      %s105 = sphi 0, %s104
      %s119 = sphi 0, %s105
      %s123 = sphi 0, %s123
      %s125 = sphi 0, %s123
      %s126 = sphi 0, %s125
      %s140 = sphi 0, %s126
      %s144 = sphi 0, %s144
      %s146 = sphi 0, %s144
      %s147 = sphi 0, %s146
      %s161 = sphi 0, %s147
      %s167 = sphi 0, %s169
      %s170 = sphi 0, %s167
      %s171 = sphi 0, %s170
      %s187 = sphi 0, %s171
    $region4: #{tpu_custom_call.1} parent=1 // loop_header_branch
      %24 = sbr.rel (%p22) target = $region8
    $region5: #{tpu_custom_call.1} parent=1 // loop_body
      %s26 = ssub.s32 %s21, 1
      %s27 = ssub.s32 %s21, 2
      %s28 = sadd.s32 %s21, 1
      %s29 = ssub.s32 %s21, %s28
      %p30 = scmp.eq.s32.totalorder %s29, 0
      %s32 = sadd.s32 %s31, 1
      %s33 = scalar_select %p30, %s31, %s32
      %p36 = pneg %p30
      %p37 = scmp.eq.s32.totalorder %s21, 1
      %p38 = por %p36, %p37
      %p39 = scmp.ne.s32.totalorder %s31, %s34
      %p40 = scmp.eq.s32.totalorder %s21, 0
      %p41 = por %p39, %p40
      %p42 = scmp.ne.s32.totalorder %s31, %s34
      %p43 = scmp.eq.s32.totalorder %s26, 1
      %p44 = por %p42, %p43
      %p45 = scmp.ne.s32.totalorder %s34, %s35
      %p46 = scmp.eq.s32.totalorder %s26, 0
      %p47 = por %p45, %p46
      %p48 = scmp.ne.s32.totalorder %s34, %s35
      %p49 = scmp.eq.s32.totalorder %s27, 1
      %p50 = por %p48, %p49
      %p52 = scmp.ne.s32.totalorder %s35, %s51
      %p53 = scmp.eq.s32.totalorder %s27, 0
      %p54 = por %p52, %p53
      %s55 = ssub.s32 %s21, %s28
      %p56 = scmp.eq.s32.totalorder %s55, 0
      %s58 = sadd.s32 %s57, 1
      %s59 = scalar_select %p56, %s57, %s58
      %p62 = pneg %p56
      %p63 = scmp.eq.s32.totalorder %s21, 1
      %p64 = por %p62, %p63
      %p65 = scmp.ne.s32.totalorder %s57, %s60
      %p66 = scmp.eq.s32.totalorder %s21, 0
      %p67 = por %p65, %p66
      %p68 = scmp.ne.s32.totalorder %s57, %s60
      %p69 = scmp.eq.s32.totalorder %s26, 1
      %p70 = por %p68, %p69
      %p71 = scmp.ne.s32.totalorder %s60, %s61
      %p72 = scmp.eq.s32.totalorder %s26, 0
      %p73 = por %p71, %p72
      %p74 = scmp.ne.s32.totalorder %s60, %s61
      %p75 = scmp.eq.s32.totalorder %s27, 1
      %p76 = por %p74, %p75
      %p78 = scmp.ne.s32.totalorder %s61, %s77
      %p79 = scmp.eq.s32.totalorder %s27, 0
      %p80 = por %p78, %p79
      %s82 = sadd.s32 %s81, 1
      %p85 = scmp.eq.s32.totalorder %s21, 1
      %p86 = scmp.ne.s32.totalorder %s81, %s83
      %p87 = scmp.eq.s32.totalorder %s21, 0
      %p88 = por %p86, %p87
      %p89 = scmp.ne.s32.totalorder %s81, %s83
      %p90 = scmp.eq.s32.totalorder %s26, 1
      %p91 = por %p89, %p90
      %p92 = scmp.ne.s32.totalorder %s83, %s84
      %p93 = scmp.eq.s32.totalorder %s26, 0
      %p94 = por %p92, %p93
      %p95 = scmp.ne.s32.totalorder %s83, %s84
      %p96 = scmp.eq.s32.totalorder %s27, 1
      %p97 = por %p95, %p96
      %p99 = scmp.ne.s32.totalorder %s84, %s98
      %p100 = scmp.eq.s32.totalorder %s27, 0
      %p101 = por %p99, %p100
      %s103 = sadd.s32 %s102, 1
      %p106 = scmp.eq.s32.totalorder %s21, 1
      %p107 = scmp.ne.s32.totalorder %s102, %s104
      %p108 = scmp.eq.s32.totalorder %s21, 0
      %p109 = por %p107, %p108
      %p110 = scmp.ne.s32.totalorder %s102, %s104
      %p111 = scmp.eq.s32.totalorder %s26, 1
      %p112 = por %p110, %p111
      %p113 = scmp.ne.s32.totalorder %s104, %s105
      %p114 = scmp.eq.s32.totalorder %s26, 0
      %p115 = por %p113, %p114
      %p116 = scmp.ne.s32.totalorder %s104, %s105
      %p117 = scmp.eq.s32.totalorder %s27, 1
      %p118 = por %p116, %p117
      %p120 = scmp.ne.s32.totalorder %s105, %s119
      %p121 = scmp.eq.s32.totalorder %s27, 0
      %p122 = por %p120, %p121
      %s124 = sadd.s32 %s123, 1
      %p127 = scmp.eq.s32.totalorder %s21, 1
      %p128 = scmp.ne.s32.totalorder %s123, %s125
      %p129 = scmp.eq.s32.totalorder %s21, 0
      %p130 = por %p128, %p129
      %p131 = scmp.ne.s32.totalorder %s123, %s125
      %p132 = scmp.eq.s32.totalorder %s26, 1
      %p133 = por %p131, %p132
      %p134 = scmp.ne.s32.totalorder %s125, %s126
      %p135 = scmp.eq.s32.totalorder %s26, 0
      %p136 = por %p134, %p135
      %p137 = scmp.ne.s32.totalorder %s125, %s126
      %p138 = scmp.eq.s32.totalorder %s27, 1
      %p139 = por %p137, %p138
      %p141 = scmp.ne.s32.totalorder %s126, %s140
      %p142 = scmp.eq.s32.totalorder %s27, 0
      %p143 = por %p141, %p142
      %s145 = sadd.s32 %s144, 1
      %p148 = scmp.eq.s32.totalorder %s21, 1
      %p149 = scmp.ne.s32.totalorder %s144, %s146
      %p150 = scmp.eq.s32.totalorder %s21, 0
      %p151 = por %p149, %p150
      %p152 = scmp.ne.s32.totalorder %s144, %s146
      %p153 = scmp.eq.s32.totalorder %s26, 1
      %p154 = por %p152, %p153
      %p155 = scmp.ne.s32.totalorder %s146, %s147
      %p156 = scmp.eq.s32.totalorder %s26, 0
      %p157 = por %p155, %p156
      %p158 = scmp.ne.s32.totalorder %s146, %s147
      %p159 = scmp.eq.s32.totalorder %s27, 1
      %p160 = por %p158, %p159
      %p162 = scmp.ne.s32.totalorder %s147, %s161
      %p163 = scmp.eq.s32.totalorder %s27, 0
      %p164 = por %p162, %p163
      %s165 = ssub.s32 %s21, %s28
      %p166 = scmp.eq.s32.totalorder %s165, 0
      %s168 = sadd.s32 %s167, 1
      %s169 = scalar_select %p166, %s167, %s168
      %p172 = pneg %p166
      %p173 = scmp.eq.s32.totalorder %s21, 1
      %p174 = por %p172, %p173
      %p175 = scmp.ne.s32.totalorder %s167, %s170
      %p176 = scmp.eq.s32.totalorder %s21, 0
      %p177 = por %p175, %p176
      %p178 = scmp.ne.s32.totalorder %s167, %s170
      %p179 = scmp.eq.s32.totalorder %s26, 1
      %p180 = por %p178, %p179
      %p181 = scmp.ne.s32.totalorder %s170, %s171
      %p182 = scmp.eq.s32.totalorder %s26, 0
      %p183 = por %p181, %p182
      %p184 = scmp.ne.s32.totalorder %s170, %s171
      %p185 = scmp.eq.s32.totalorder %s27, 1
      %p186 = por %p184, %p185
      %p188 = scmp.ne.s32.totalorder %s171, %s187
      %p189 = scmp.eq.s32.totalorder %s27, 0
      %p190 = por %p188, %p189
      %p191 = scmp.le.s32.totalorder 1, %s21
      %p192 = scmp.lt.s32.totalorder %s21, 3
      %p193 = pnand %p191, %p192
      %p194 = pneg %p193
      // Predicated region
      $region9: #{tpu_custom_call.1} parent=5 // pred_check
        _
      $region10: #{tpu_custom_call.1} parent=5 // pred_check_branch
        %196 = sbr.rel (%p193) target = $region12
      $region11: #{tpu_custom_call.1} parent=5 // pred_region
        %s197 = ssub.s32 %s21, 1
        // Predicated region
        $region13: #{tpu_custom_call.1} parent=11 // pred_check
          %p198 = pneg %p94
        $region14: #{tpu_custom_call.1} parent=11 // pred_check_branch
          %200 = sbr.rel (%p198) target = $region16
        $region15: #{tpu_custom_call.1} parent=11 // pred_region
          %s202 = ssub.s32 512, 512
          %203 = vsyncadd [#allocation6], %s202
          %s204 = sshll.u32 [#allocation7], 4
          %s205 = int_to_ptr.vmem [resolvable:$true] %s204
          %210 = dma.hbm_to_vmem [thread:$0]  %s2, 512, %s205, [#allocation6], 128, 128, 8
        $region16: #{tpu_custom_call.1} parent=11 // pred_fallthru
          _
        // Predicated region
        $region17: #{tpu_custom_call.1} parent=11 // pred_check
          %p211 = pneg %p115
        $region18: #{tpu_custom_call.1} parent=11 // pred_check_branch
          %213 = sbr.rel (%p211) target = $region20
        $region19: #{tpu_custom_call.1} parent=11 // pred_region
          _
        $region20: #{tpu_custom_call.1} parent=11 // pred_fallthru
          _
        // Predicated region
        $region21: #{tpu_custom_call.1} parent=11 // pred_check
          %p214 = pneg %p136
        $region22: #{tpu_custom_call.1} parent=11 // pred_check_branch
          %216 = sbr.rel (%p214) target = $region24
        $region23: #{tpu_custom_call.1} parent=11 // pred_region
          _
        $region24: #{tpu_custom_call.1} parent=11 // pred_fallthru
          _
        // Predicated region
        $region25: #{tpu_custom_call.1} parent=11 // pred_check
          %p217 = pneg %p157
        $region26: #{tpu_custom_call.1} parent=11 // pred_check_branch
          %219 = sbr.rel (%p217) target = $region28
        $region27: #{tpu_custom_call.1} parent=11 // pred_region
          _
        $region28: #{tpu_custom_call.1} parent=11 // pred_fallthru
          _
      $region12: #{tpu_custom_call.1} parent=5 // pred_fallthru
        _
      %p220 = scmp.lt.s32.totalorder %s21, 2
      // Predicated region
      $region29: #{tpu_custom_call.1} parent=5 // pred_check
        %p221 = pneg %p220
      $region30: #{tpu_custom_call.1} parent=5 // pred_check_branch
        %223 = sbr.rel (%p221) target = $region32
      $region31: #{tpu_custom_call.1} parent=5 // pred_region
        // Predicated region
        $region33: #{tpu_custom_call.1} parent=31 // pred_check
          %p224 = pneg %p41
        $region34: #{tpu_custom_call.1} parent=31 // pred_check_branch
          %226 = sbr.rel (%p224) target = $region36
        $region35: #{tpu_custom_call.1} parent=31 // pred_region
          %s227 = sand.u32 %s31, 1
          %s228 = scalar_lea.sflag [#allocation3], %s227
          %s229 = sand.u32 %s31, 1
          %s230 = smul.addr %s229, 8
          %s231 = scalar_lea.vmem [#allocation2], %s230
          %s233 = ssub.s32 128, 128
          %234 = vsyncadd %s228, %s233
          %s235 = smul.addr %s21, 128
          %s236 = scalar_lea.hbm %s0, %s235
          %s238 = sshll.u32 %s231, 4
          %s239 = int_to_ptr.vmem [resolvable:$true] %s238
          %241 = dma.hbm_to_vmem [thread:$0]  %s236, 128, %s239, %s228
        $region36: #{tpu_custom_call.1} parent=31 // pred_fallthru
          _
        // Predicated region
        $region37: #{tpu_custom_call.1} parent=31 // pred_check
          %p242 = pneg %p67
        $region38: #{tpu_custom_call.1} parent=31 // pred_check_branch
          %244 = sbr.rel (%p242) target = $region40
        $region39: #{tpu_custom_call.1} parent=31 // pred_region
          %s245 = sand.u32 %s21, 1
          %s246 = scalar_lea.sflag [#allocation6], %s245
          %s247 = sand.u32 %s57, 1
          %s248 = smul.addr %s247, 8
          %s249 = scalar_lea.vmem [#allocation5], %s248
          %s251 = ssub.s32 128, 128
          %252 = vsyncadd %s246, %s251
          %s253 = smul.addr %s21, 128
          %s254 = scalar_lea.hbm %s1, %s253
          %s256 = sshll.u32 %s249, 4
          %s257 = int_to_ptr.vmem [resolvable:$true] %s256
          %259 = dma.hbm_to_vmem [thread:$0]  %s254, 128, %s257, %s246
        $region40: #{tpu_custom_call.1} parent=31 // pred_fallthru
          _
      $region32: #{tpu_custom_call.1} parent=5 // pred_fallthru
        _
      %p260 = scmp.le.s32.totalorder 1, %s21
      %p261 = scmp.lt.s32.totalorder %s21, 3
      %p262 = pnand %p260, %p261
      %p263 = pneg %p262
      // Predicated region
      $region41: #{tpu_custom_call.1} parent=5 // pred_check
        _
      $region42: #{tpu_custom_call.1} parent=5 // pred_check_branch
        %265 = sbr.rel (%p262) target = $region44
      $region43: #{tpu_custom_call.1} parent=5 // pred_region
        %s266 = ssub.s32 %s21, 1
        %s267 = sand.u32 %s34, 1
        %s268 = scalar_lea.sflag [#allocation3], %s267
        %s269 = sand.u32 %s34, 1
        %s270 = smul.addr %s269, 8
        %s271 = scalar_lea.vmem [#allocation2], %s270
        // Predicated region
        $region45: #{tpu_custom_call.1} parent=43 // pred_check
          %p272 = pneg %p47
        $region46: #{tpu_custom_call.1} parent=43 // pred_check_branch
          %274 = sbr.rel (%p272) target = $region48
        $region47: #{tpu_custom_call.1} parent=43 // pred_region
          %275 = dma.done %s268, 128
        $region48: #{tpu_custom_call.1} parent=43 // pred_fallthru
          _
        %s276 = sand.u32 %s26, 1
        %s277 = scalar_lea.sflag [#allocation6], %s276
        %s278 = sand.u32 %s60, 1
        %s279 = smul.addr %s278, 8
        %s280 = scalar_lea.vmem [#allocation5], %s279
        // Predicated region
        $region49: #{tpu_custom_call.1} parent=43 // pred_check
          %p281 = pneg %p73
        $region50: #{tpu_custom_call.1} parent=43 // pred_check_branch
          %283 = sbr.rel (%p281) target = $region52
        $region51: #{tpu_custom_call.1} parent=43 // pred_region
          %284 = dma.done %s277, 128
        $region52: #{tpu_custom_call.1} parent=43 // pred_fallthru
          _
        // Predicated region
        $region53: #{tpu_custom_call.1} parent=43 // pred_check
          %p285 = pneg %p94
        $region54: #{tpu_custom_call.1} parent=43 // pred_check_branch
          %287 = sbr.rel (%p285) target = $region56
        $region55: #{tpu_custom_call.1} parent=43 // pred_region
          %288 = dma.done [#allocation6], 512
        $region56: #{tpu_custom_call.1} parent=43 // pred_fallthru
          _
        %s289 = sand.u32 %s34, 1
        %s290 = scalar_lea.sflag [#allocation3], %s289
        %s291 = sand.u32 %s34, 1
        %s292 = smul.addr %s291, 8
        %s293 = scalar_lea.vmem [#allocation2], %s292
        %p294 = pneg %p47
        %p295 = pneg %p44
        %s296 = sand.u32 %s26, 1
        %s297 = scalar_lea.sflag [#allocation6], %s296
        %s298 = sand.u32 %s60, 1
        %s299 = smul.addr %s298, 8
        %s300 = scalar_lea.vmem [#allocation5], %s299
        %p301 = pneg %p73
        %p302 = pneg %p70
        %p303 = pneg %p94
        %p304 = pneg %p91
        %p305 = pneg %p115
        %p306 = pneg %p112
        %p307 = pneg %p136
        %p308 = pneg %p133
        %p309 = pneg %p157
        %p310 = pneg %p154
        %p311 = pneg %p183
        %p312 = pneg %p180
        %s313 = sand.u32 %s170, 1
        %s314 = scalar_lea.sflag [#allocation4], %s313
        %s315 = sand.u32 %s170, 1
        %s316 = smul.addr %s315, 8
        %s317 = scalar_lea.vmem [#allocation8], %s316
        %v318 = vld [vmem:[%s271] sm:$0xff]
        %v319 = vld [vmem:[#allocation7] sm:$0xff]
        %v320 = vld [vmem:[#allocation7 + $0x8] sm:$0xff]
        %v321 = vld [vmem:[#allocation7 + $0x10] sm:$0xff]
        %v322 = vld [vmem:[#allocation7 + $0x18] sm:$0xff]
        %v323 = vld [vmem:[%s3] sm:$0x1]
        %v325 = vlaneseq
        %v326 = vshrl.u32 %v325, 7
        %v327 = vsub.s32 0, %v326
        %v328 = vrot.slane %v323, %v327
        %vm330 = vcmask 261120
        %v332 = vsel %vm330, %v318, 0
        %334 = vmatprep.subr.mxu0 0.0
        %335 = vmatpush1.msra.mxu0 0.0
        %336 = vmatprep.subr.mxu0 0.0
        %337 = vmatpush1.msra.mxu0 0.0
        %338 = vmatprep.subr.mxu0 0.0
        %339 = vmatpush1.msra.mxu0 0.0
        %340 = vmatprep.subr.mxu0 0.0
        %341 = vmatpush1.msra.mxu0 0.0
        %342 = vmatprep.subr.mxu0 0.0
        %343 = vmatpush1.msra.mxu0 0.0
        %344 = vmatprep.subr.mxu0 0.0
        %345 = vmatpush1.msra.mxu0 0.0
        %346 = vmatprep.subr.mxu0 0.0
        %347 = vmatpush1.msra.mxu0 0.0
        %348 = vmatprep.subr.mxu0 0.0
        %349 = vmatpush1.msra.mxu0 0.0
        %350 = vmatprep.subr.mxu0 0.0
        %351 = vmatpush1.msra.mxu0 0.0
        %352 = vmatprep.subr.mxu0 0.0
        %353 = vmatpush1.msra.mxu0 0.0
        %354 = vmatprep.subr.mxu0 0.0
        %355 = vmatpush1.msra.mxu0 0.0
        %356 = vmatprep.subr.mxu0 0.0
        %357 = vmatpush1.msra.mxu0 0.0
        %358 = vmatprep.subr.mxu0 0.0
        %359 = vmatpush1.msra.mxu0 %v322
        %360 = vmatprep.subr.mxu0 0.0
        %361 = vmatpush1.msra.mxu0 %v321
        %362 = vmatprep.subr.mxu0 0.0
        %363 = vmatpush1.msra.mxu0 %v320
        %364 = vmatprep.subr.mxu0 0.0
        %365 = vmatpush1.msra.mxu0 %v319
        %366 = vmatprep.subr.mxu0 0.0
        %367 = vmatpush2.msra.mxu0 0.0
        %368 = vmatprep.subr.mxu0 0.0
        %369 = vmatpush2.msra.mxu0 0.0
        %370 = vmatprep.subr.mxu0 0.0
        %371 = vmatpush2.msra.mxu0 0.0
        %372 = vmatprep.subr.mxu0 0.0
        %373 = vmatpush2.msra.mxu0 0.0
        %374 = vmatprep.subr.mxu0 0.0
        %375 = vmatpush2.msra.mxu0 0.0
        %376 = vmatprep.subr.mxu0 0.0
        %377 = vmatpush2.msra.mxu0 0.0
        %378 = vmatprep.subr.mxu0 0.0
        %379 = vmatpush2.msra.mxu0 0.0
        %380 = vmatprep.subr.mxu0 0.0
        %381 = vmatpush2.msra.mxu0 0.0
        %382 = vmatprep.subr.mxu0 0.0
        %383 = vmatpush2.msra.mxu0 0.0
        %384 = vmatprep.subr.mxu0 0.0
        %385 = vmatpush2.msra.mxu0 0.0
        %386 = vmatprep.subr.mxu0 0.0
        %387 = vmatpush2.msra.mxu0 0.0
        %388 = vmatprep.subr.mxu0 0.0
        %389 = vmatpush2.msra.mxu0 0.0
        %390 = vmatprep.subr.mxu0 0.0
        %391 = vmatpush2.msra.mxu0 0.0
        %392 = vmatprep.subr.mxu0 0.0
        %393 = vmatpush2.msra.mxu0 0.0
        %394 = vmatprep.subr.mxu0 0.0
        %395 = vmatpush2.msra.mxu0 0.0
        %396 = vmatprep.subr.mxu0 0.0
        %397 = vmatpush2.msra.mxu0 0.0
        %398 = vmatprep.mubr.f32.mxu0 0.0
        %399 = vmatmul.mubr.f32.gmra.mxu0 %v332
        %v400 = vpop.f32.mrf.mxu0
        %v401 = vadd.f32 %v328, %v400
        %v402 = vpop.f32.mrf.mxu0
        %403 = vdwg.mxu0
        %v404 = vld [vmem:[%s280] sm:$0xff]
        %v405 = vadd.f32 %v401, %v404
        %v406 = vsel %vm330, %v405, 0.0
        %407 = vadd.xlane.f32.xlu0 %v406
        %v408 = vpop.xlane.xlu0 %407
        %v409 = vmul.f32 %v408, 0.03125
        %v410 = vmul.f32 %v405, %v405
        %v411 = vsel %vm330, %v410, 0.0
        %412 = vadd.xlane.f32.xlu0 %v411
        %v413 = vpop.xlane.xlu0 %412
        %v414 = vmul.f32 %v413, 0.03125
        %v415 = vmul.f32 %v409, %v409
        %v416 = vsub.f32 %v414, %v415
        %v417 = vadd.f32 %v416, 1e-05
        %v418 = vrsqrt.pop %v417
        %v419 = vsub.f32 %v405, %v409
        %v420 = vmul.f32 %v419, %v418
        %v421 = vld [vmem:[%s4] sm:$0x1]
        %v423 = vlaneseq
        %v424 = vshrl.u32 %v423, 7
        %v425 = vsub.s32 0, %v424
        %v426 = vrot.slane %v421, %v425
        %v428 = vmul.f32 %v420, %v426
        %v429 = vld [vmem:[%s5] sm:$0x1]
        %v431 = vlaneseq
        %v432 = vshrl.u32 %v431, 7
        %v433 = vsub.s32 0, %v432
        %v434 = vrot.slane %v429, %v433
        %v436 = vadd.f32 %v428, %v434
        %437 = vst.msk [vmem:[%s317] sm:$0xff] %vm330, %v436
        %s438 = sand.u32 %s170, 1
        %s439 = scalar_lea.sflag [#allocation4], %s438
        %s440 = sand.u32 %s170, 1
        %s441 = smul.addr %s440, 8
        %s442 = scalar_lea.vmem [#allocation8], %s441
        // Predicated region
        $region57: #{tpu_custom_call.1} parent=43 // pred_check
          %p443 = pneg %p180
        $region58: #{tpu_custom_call.1} parent=43 // pred_check_branch
          %445 = sbr.rel (%p443) target = $region60
        $region59: #{tpu_custom_call.1} parent=43 // pred_region
          %s447 = ssub.s32 128, 128
          %448 = vsyncadd %s439, %s447
          %s449 = smul.addr %s26, 128
          %s450 = scalar_lea.hbm %s6, %s449
          %s452 = sshll.u32 %s442, 4
          %s453 = int_to_ptr.vmem [resolvable:$true] %s452
          %455 = dma.vmem_to_hbm [thread:$0]  %s453, 128, %s450, %s439
        $region60: #{tpu_custom_call.1} parent=43 // pred_fallthru
          _
      $region44: #{tpu_custom_call.1} parent=5 // pred_fallthru
        _
      %p456 = scmp.le.s32.totalorder 2, %s21
      // Predicated region
      $region61: #{tpu_custom_call.1} parent=5 // pred_check
        %p457 = pneg %p456
      $region62: #{tpu_custom_call.1} parent=5 // pred_check_branch
        %459 = sbr.rel (%p457) target = $region64
      $region63: #{tpu_custom_call.1} parent=5 // pred_region
        %s460 = ssub.s32 %s21, 2
        // Predicated region
        $region65: #{tpu_custom_call.1} parent=63 // pred_check
          %p461 = pneg %p186
        $region66: #{tpu_custom_call.1} parent=63 // pred_check_branch
          %463 = sbr.rel (%p461) target = $region68
        $region67: #{tpu_custom_call.1} parent=63 // pred_region
          %s464 = sand.u32 %s171, 1
          %s465 = scalar_lea.sflag [#allocation4], %s464
          %s466 = sand.u32 %s171, 1
          %s467 = smul.addr %s466, 8
          %s468 = scalar_lea.vmem [#allocation8], %s467
          %469 = dma.done %s465, 128
        $region68: #{tpu_custom_call.1} parent=63 // pred_fallthru
          _
      $region64: #{tpu_custom_call.1} parent=5 // pred_fallthru
        _
    $region6: #{tpu_custom_call.1} parent=1 // loop_footer
      %s25 = sadd.s32 1, %s21
    $region7: #{tpu_custom_call.1} parent=1 // loop_footer_branch
      %20 = sbr.rel target = $region3
    $region8: #{tpu_custom_call.1} parent=1 // loop_exit
      _
    %470 = vsyncpa [#allocation3], 1
    %s471 = scalar_lea.sflag [#allocation3], 1
    %472 = vsyncpa %s471, 1
    %473 = vsyncpa [#allocation6], 1
    %s474 = scalar_lea.sflag [#allocation6], 1
    %475 = vsyncpa %s474, 1
    %476 = vsyncpa [#allocation4], 1
    %s477 = scalar_lea.sflag [#allocation4], 1
    %478 = vsyncpa %s477, 1

</llo_original>
